<compile_context>
chip_gen: v5e
topology: v5e:2x2
jax: 0.10.0
libtpu: 0.0.40
codegen_flags: <defaults>
</compile_context>

<pallas_src>
import jax
import jax.numpy as jnp
from jax.experimental import pallas as pl
from jax.experimental.pallas import tpu as pltpu


def _round_up(x, m):
    return ((x + m - 1) // m) * m


# ---------------------------------------------------------------------------
# Fused kernel factory: CLS + Tanhshrink masked mean for every silo and the
# output Linear as per-segment partial dots — all in one kernel body.
# ---------------------------------------------------------------------------
def _make_fused_kernel(n_silos, dims_in, cls_row_offs, mean_row_offs):
    def kernel(*refs):
        h_refs = refs[:n_silos]                      # each (TB, S_i, D_i), bf16/f32
        m_refs = refs[n_silos:2 * n_silos]           # each (TB, S_i),      f32/bf16
        w_ref = refs[2 * n_silos]                    # (K_used, N_pad)
        b_ref = refs[2 * n_silos + 1]                # (1, N_pad)
        o_ref = refs[2 * n_silos + 2]                # (TB, N_pad) f32

        acc = None
        for i in range(n_silos):
            d = dims_in[i]

            # Load the silo block once; upcast to f32 for all elementwise math
            # (v5e has no bf16 VPU/EUP datapath).
            h = h_refs[i][...].astype(jnp.float32)               # (TB, S, D)

            # --- CLS path (raw hidden state row 0, already VMEM-resident). ---
            cls = h[:, 0, :]                                     # (TB, D)
            w_cls = w_ref[cls_row_offs[i]:cls_row_offs[i] + d, :].astype(jnp.float32)
            part = jnp.dot(cls, w_cls, preferred_element_type=jnp.float32)
            acc = part if acc is None else acc + part

            # --- Masked Tanhshrink mean: VPU multiply + sequence (sublane) reduce. ---
            shr = h - jnp.tanh(h)                                # EUP tanh + VPU sub, f32
            mq = m_refs[i][...].astype(jnp.float32)              # (TB, S)
            msum = jnp.sum(shr * mq[:, :, None], axis=1)         # (TB, D) — no MXU matvec
            cnt = jnp.sum(mq, axis=1, keepdims=True)             # (TB, 1)
            inv = pl.reciprocal(jnp.maximum(cnt, 1e-9), approx=True)   # EUP vrcp
            mean = msum * inv                                    # (TB, D)
            w_mean = w_ref[mean_row_offs[i]:mean_row_offs[i] + d, :].astype(jnp.float32)
            acc = acc + jnp.dot(mean, w_mean, preferred_element_type=jnp.float32)

        o_ref[...] = (acc + b_ref[...].astype(jnp.float32)).astype(o_ref.dtype)

    return kernel


# ---------------------------------------------------------------------------
# One-time (parameter-init time) padding of the Linear params to a lane-dense N.
# ---------------------------------------------------------------------------
def prepare_params(W, b, param_dtype=None):
    """W: [2*sum(dims_in), dim_out]; b: [1, dim_out] or [dim_out]."""
    if param_dtype is None:
        param_dtype = W.dtype
    k_used, dim_out = int(W.shape[0]), int(W.shape[1])
    n_pad = _round_up(dim_out, 128)
    w_pad = jnp.zeros((k_used, n_pad), param_dtype).at[:, :dim_out].set(W.astype(param_dtype))
    b_pad = jnp.zeros((1, n_pad), param_dtype).at[0, :dim_out].set(
        jnp.asarray(b, param_dtype).reshape(-1))
    return w_pad, b_pad, dim_out


# ---------------------------------------------------------------------------
# Module wrapper
# ---------------------------------------------------------------------------
def anathem_multi_silo_pooler(hidden_states, attention_masks, W_pad, b_pad, dim_out):
    """hidden_states: list of [B, S_i, D_i] (bf16 recommended);
    attention_masks: list of [B, S_i]; W_pad: [2*sum(D_i), N_pad]; b_pad: [1, N_pad]."""
    n = len(hidden_states)
    B = int(hidden_states[0].shape[0])
    seq_lens = [int(h.shape[1]) for h in hidden_states]
    dims_in = [int(h.shape[2]) for h in hidden_states]
    K_used = int(W_pad.shape[0])
    N_pad = int(W_pad.shape[1])
    assert K_used == 2 * sum(dims_in)

    # Static row offsets into W (torch concat order: all CLS blocks, then all means).
    cls_offs, mean_offs, off = [], [], 0
    for d in dims_in:
        cls_offs.append(off)
        off += d
    for d in dims_in:
        mean_offs.append(off)
        off += d

    h_isz = jnp.dtype(hidden_states[0].dtype).itemsize
    m_isz = jnp.dtype(attention_masks[0].dtype).itemsize
    w_isz = jnp.dtype(W_pad.dtype).itemsize

    # Per-grid-step VMEM footprint estimate (double-buffered inputs + f32 intermediates).
    def vmem_need(tb):
        need = 0
        for S, D in zip(seq_lens, dims_in):
            need += 2 * tb * S * D * h_isz          # double-buffered hidden block
            need += 2 * tb * S * D * 4              # f32 upcast + tanhshrink intermediates
            need += 2 * tb * S * m_isz              # mask block
        need += 2 * K_used * N_pad * w_isz + K_used * N_pad * 4   # W block (+ f32 upcast)
        need += 2 * tb * N_pad * 4 + 4 * N_pad      # out block + bias
        return need

    # Per-chip VMEM budget (v7x has 64 MiB per TC; v5e/v6e have 128 MiB).
    try:
        vmem_cap = int(pltpu.get_tpu_info().vmem_capacity_bytes)
    except Exception:
        vmem_cap = 64 * 1024 * 1024                 # conservative fallback (v7x per-TC)
    vmem_budget = min(int(0.70 * vmem_cap), 96 * 1024 * 1024)

    # Batch tile: largest candidate that divides B and fits the VMEM budget;
    # prefer >= 2 grid steps so "parallel" can use both v7x TensorCores.
    cands = [c for c in (256, 128, 64, 32, 16, 8)
             if B % c == 0 and vmem_need(c) <= vmem_budget]
    pref = [c for c in cands if B // c >= 2]
    TB = pref[0] if pref else (cands[0] if cands else B)
    grid = (B // TB,)

    kernel = _make_fused_kernel(n, dims_in, cls_offs, mean_offs)

    in_specs = (
        [pl.BlockSpec((TB, S, D), lambda i: (i, 0, 0))
         for S, D in zip(seq_lens, dims_in)]
        + [pl.BlockSpec((TB, S), lambda i: (i, 0)) for S in seq_lens]
        + [pl.BlockSpec((K_used, N_pad), lambda i: (0, 0)),
           pl.BlockSpec((1, N_pad), lambda i: (0, 0))]
    )
    out_spec = pl.BlockSpec((TB, N_pad), lambda i: (i, 0))

    flops = 2 * B * K_used * N_pad + sum(4 * B * S * D for S, D in zip(seq_lens, dims_in))
    transcendentals = sum(B * S * D for S, D in zip(seq_lens, dims_in))
    bytes_accessed = (sum(B * S * D * h_isz + B * S * m_isz
                          for S, D in zip(seq_lens, dims_in))
                      + K_used * N_pad * w_isz + N_pad * w_isz + B * N_pad * 4)

    need = vmem_need(TB)
    vmem_limit = int(max(32 * 1024 * 1024, min(2 * need, vmem_budget), need))

    out_pad = pl.pallas_call(
        kernel,
        out_shape=jax.ShapeDtypeStruct((B, N_pad), jnp.float32),
        grid=grid,
        in_specs=in_specs,
        out_specs=out_spec,
        compiler_params=pltpu.CompilerParams(
            dimension_semantics=("parallel",),
            vmem_limit_bytes=vmem_limit,
        ),
        cost_estimate=pl.CostEstimate(
            flops=int(flops),
            transcendentals=int(transcendentals),
            bytes_accessed=int(bytes_accessed)),
    )(*hidden_states, *attention_masks, W_pad, b_pad)

    return out_pad[:, :dim_out]


# ---------------------------------------------------------------------------
# Pure-JAX reference (f32 math on the same inputs) for correctness checking
# ---------------------------------------------------------------------------
def _reference(hidden_states, attention_masks, W, b):
    hs = [h.astype(jnp.float32) for h in hidden_states]
    ms = [m.astype(jnp.float32) for m in attention_masks]
    Wf = W.astype(jnp.float32)
    bf = jnp.asarray(b, jnp.float32).reshape(1, -1)
    cls_list = [h[:, 0, :] for h in hs]
    mean_list = []
    for h, m in zip(hs, ms):
        shr = h - jnp.tanh(h)
        mexp = m[:, :, None]
        s = jnp.sum(shr * mexp, axis=1)
        sm = jnp.maximum(jnp.sum(mexp, axis=1), 1e-9)
        mean_list.append(s / sm)
    pooled = jnp.concatenate(cls_list + mean_list, axis=1)
    return pooled @ Wf + bf


if __name__ == "__main__":
    key = jax.random.PRNGKey(0)

    # Small config consistent with the module's __init__:
    #   hidden_size = 32, dim_out = hidden_size * 2 = 64
    #   dims_in = [dim_out, dim_out // 2, dim_out // 4] = [64, 32, 16]
    B = 2
    hidden_size = 32
    dim_out = hidden_size * 2
    dims_in = [dim_out, dim_out // 2, dim_out // 4]
    seq_lens = [8, 8, 8]
    dim_in = sum(dims_in)                     # 112

    keys = jax.random.split(key, 16)
    hidden_states = []
    attention_masks = []
    for i, (S, D) in enumerate(zip(seq_lens, dims_in)):
        h = jax.random.normal(keys[2 * i], (B, S, D), dtype=jnp.float32)
        m = jax.random.bernoulli(keys[2 * i + 1], p=0.8, shape=(B, S)).astype(jnp.float32)
        m = m.at[:, 0].set(1.0)               # CLS position always valid
        hidden_states.append(h.astype(jnp.bfloat16))   # bf16 HBM operands (f32 math in-kernel)
        attention_masks.append(m)                      # masks stay f32 (0/1 exact either way)

    # out_transform Linear params: torch weight is [dim_out, 2*dim_in]; stored transposed here.
    W = (jax.random.normal(keys[10], (2 * dim_in, dim_out), dtype=jnp.float32)
         * (1.0 / jnp.sqrt(2.0 * dim_in))).astype(jnp.bfloat16)
    bvec = (jax.random.normal(keys[11], (1, dim_out), dtype=jnp.float32) * 0.01).astype(jnp.bfloat16)

    # Parameter-init-time padding (hoisted out of the per-call wrapper).
    W_pad, b_pad, dim_out_p = prepare_params(W, bvec)

    out = anathem_multi_silo_pooler(hidden_states, attention_masks, W_pad, b_pad, dim_out_p)
    out = jax.block_until_ready(out)

    ref = _reference(hidden_states, attention_masks, W, bvec)
    assert out.shape == (B, dim_out), out.shape
    assert jnp.allclose(out, ref, atol=1e-3, rtol=1e-3), "mismatch vs reference"

    print("KERNEL_OK")
</pallas_src>

<mosaic_0001>
module attributes {stable_mosaic.version = 11 : i64} {
  func.func @kernel(%arg0: i32, %arg1: memref<2x8x64xbf16, #tpu.memory_space<vmem>>, %arg2: memref<2x8x32xbf16, #tpu.memory_space<vmem>>, %arg3: memref<2x8x16xbf16, #tpu.memory_space<vmem>>, %arg4: memref<2x8xf32, #tpu.memory_space<vmem>>, %arg5: memref<2x8xf32, #tpu.memory_space<vmem>>, %arg6: memref<2x8xf32, #tpu.memory_space<vmem>>, %arg7: memref<224x128xbf16, #tpu.memory_space<vmem>>, %arg8: memref<1x128xbf16, #tpu.memory_space<vmem>>, %arg9: memref<2x128xf32, #tpu.memory_space<vmem>>) attributes {dimension_semantics = [#tpu.dimension_semantics<parallel>], iteration_bounds = array<i64: 1>, scalar_prefetch = 0 : i64, scratch_operands = 0 : i64, tpu.core_type = #tpu.core_type<tc>, window_params = [{transform_indices = @transform_0, window_bounds = array<i64: 2, 8, 64>}, {transform_indices = @transform_1, window_bounds = array<i64: 2, 8, 32>}, {transform_indices = @transform_2, window_bounds = array<i64: 2, 8, 16>}, {transform_indices = @transform_3, window_bounds = array<i64: 2, 8>}, {transform_indices = @transform_4, window_bounds = array<i64: 2, 8>}, {transform_indices = @transform_5, window_bounds = array<i64: 2, 8>}, {pipeline_mode = #tpu.pipeline_mode<synchronous>, transform_indices = @transform_6, window_bounds = array<i64: 224, 128>}, {pipeline_mode = #tpu.pipeline_mode<synchronous>, transform_indices = @transform_7, window_bounds = array<i64: 1, 128>}, {transform_indices = @transform_8, window_bounds = array<i64: 2, 128>}]} {
    %c0 = arith.constant 0 : index
    %c0_0 = arith.constant 0 : index
    %c0_1 = arith.constant 0 : index
    %0 = vector.load %arg1[%c0, %c0_0, %c0_1] : memref<2x8x64xbf16, #tpu.memory_space<vmem>>, vector<2x8x64xbf16>
    %1 = arith.extf %0 : vector<2x8x64xbf16> to vector<2x8x64xf32>
    %2 = vector.extract_strided_slice %1 {offsets = [0, 0, 0], sizes = [2, 1, 64], strides = [1, 1, 1]} : vector<2x8x64xf32> to vector<2x1x64xf32>
    %3 = vector.shape_cast %2 : vector<2x1x64xf32> to vector<2x64xf32>
    %c0_2 = arith.constant 0 : index
    %c0_3 = arith.constant 0 : index
    %4 = vector.load %arg7[%c0_2, %c0_3] : memref<224x128xbf16, #tpu.memory_space<vmem>>, vector<64x128xbf16>
    %5 = arith.extf %4 : vector<64x128xbf16> to vector<64x128xf32>
    %cst = arith.constant dense<0.000000e+00> : vector<2x128xf32>
    %6 = tpu.matmul %3, %5, %cst {dimension_numbers = #tpu.dot_dimension_numbers<[1], [0], [0], [1], [0, 0, 1, 1], [], []>} : vector<2x64xf32>, vector<64x128xf32>, vector<2x128xf32> -> vector<2x128xf32>
    %7 = math.tanh %1 : vector<2x8x64xf32>
    %8 = arith.subf %1, %7 : vector<2x8x64xf32>
    %c0_4 = arith.constant 0 : index
    %c0_5 = arith.constant 0 : index
    %9 = vector.load %arg4[%c0_4, %c0_5] : memref<2x8xf32, #tpu.memory_space<vmem>>, vector<2x8xf32>
    %10 = vector.shape_cast %9 : vector<2x8xf32> to vector<2x8x1xf32>
    %11 = vector.broadcast %10 : vector<2x8x1xf32> to vector<2x8x64xf32>
    %12 = arith.mulf %8, %11 : vector<2x8x64xf32>
    %cst_6 = arith.constant dense<0.000000e+00> : vector<2x64xf32>
    %13 = vector.multi_reduction <add>, %12, %cst_6 [1] : vector<2x8x64xf32> to vector<2x64xf32>
    %cst_7 = arith.constant dense<0.000000e+00> : vector<2xf32>
    %14 = vector.multi_reduction <add>, %9, %cst_7 [1] : vector<2x8xf32> to vector<2xf32>
    %15 = vector.shape_cast %14 : vector<2xf32> to vector<2x1xf32>
    %cst_8 = arith.constant 9.99999971E-10 : f32
    %16 = vector.broadcast %cst_8 : f32 to vector<2x1xf32>
    %17 = arith.maximumf %15, %16 : vector<2x1xf32>
    %18 = tpu.reciprocal %17 {approx = true} : vector<2x1xf32> -> vector<2x1xf32>
    %19 = vector.broadcast %18 : vector<2x1xf32> to vector<2x64xf32>
    %20 = arith.mulf %13, %19 : vector<2x64xf32>
    %c112 = arith.constant 112 : index
    %c0_9 = arith.constant 0 : index
    %21 = vector.load %arg7[%c112, %c0_9] : memref<224x128xbf16, #tpu.memory_space<vmem>>, vector<64x128xbf16>
    %22 = arith.extf %21 : vector<64x128xbf16> to vector<64x128xf32>
    %cst_10 = arith.constant dense<0.000000e+00> : vector<2x128xf32>
    %23 = tpu.matmul %20, %22, %cst_10 {dimension_numbers = #tpu.dot_dimension_numbers<[1], [0], [0], [1], [0, 0, 1, 1], [], []>} : vector<2x64xf32>, vector<64x128xf32>, vector<2x128xf32> -> vector<2x128xf32>
    %24 = arith.addf %6, %23 : vector<2x128xf32>
    %c0_11 = arith.constant 0 : index
    %c0_12 = arith.constant 0 : index
    %c0_13 = arith.constant 0 : index
    %25 = vector.load %arg2[%c0_11, %c0_12, %c0_13] : memref<2x8x32xbf16, #tpu.memory_space<vmem>>, vector<2x8x32xbf16>
    %26 = arith.extf %25 : vector<2x8x32xbf16> to vector<2x8x32xf32>
    %27 = vector.extract_strided_slice %26 {offsets = [0, 0, 0], sizes = [2, 1, 32], strides = [1, 1, 1]} : vector<2x8x32xf32> to vector<2x1x32xf32>
    %28 = vector.shape_cast %27 : vector<2x1x32xf32> to vector<2x32xf32>
    %c64 = arith.constant 64 : index
    %c0_14 = arith.constant 0 : index
    %29 = vector.load %arg7[%c64, %c0_14] : memref<224x128xbf16, #tpu.memory_space<vmem>>, vector<32x128xbf16>
    %30 = arith.extf %29 : vector<32x128xbf16> to vector<32x128xf32>
    %cst_15 = arith.constant dense<0.000000e+00> : vector<2x128xf32>
    %31 = tpu.matmul %28, %30, %cst_15 {dimension_numbers = #tpu.dot_dimension_numbers<[1], [0], [0], [1], [0, 0, 1, 1], [], []>} : vector<2x32xf32>, vector<32x128xf32>, vector<2x128xf32> -> vector<2x128xf32>
    %32 = arith.addf %24, %31 : vector<2x128xf32>
    %33 = math.tanh %26 : vector<2x8x32xf32>
    %34 = arith.subf %26, %33 : vector<2x8x32xf32>
    %c0_16 = arith.constant 0 : index
    %c0_17 = arith.constant 0 : index
    %35 = vector.load %arg5[%c0_16, %c0_17] : memref<2x8xf32, #tpu.memory_space<vmem>>, vector<2x8xf32>
    %36 = vector.shape_cast %35 : vector<2x8xf32> to vector<2x8x1xf32>
    %37 = vector.broadcast %36 : vector<2x8x1xf32> to vector<2x8x32xf32>
    %38 = arith.mulf %34, %37 : vector<2x8x32xf32>
    %cst_18 = arith.constant dense<0.000000e+00> : vector<2x32xf32>
    %39 = vector.multi_reduction <add>, %38, %cst_18 [1] : vector<2x8x32xf32> to vector<2x32xf32>
    %cst_19 = arith.constant dense<0.000000e+00> : vector<2xf32>
    %40 = vector.multi_reduction <add>, %35, %cst_19 [1] : vector<2x8xf32> to vector<2xf32>
    %41 = vector.shape_cast %40 : vector<2xf32> to vector<2x1xf32>
    %cst_20 = arith.constant 9.99999971E-10 : f32
    %42 = vector.broadcast %cst_20 : f32 to vector<2x1xf32>
    %43 = arith.maximumf %41, %42 : vector<2x1xf32>
    %44 = tpu.reciprocal %43 {approx = true} : vector<2x1xf32> -> vector<2x1xf32>
    %45 = vector.broadcast %44 : vector<2x1xf32> to vector<2x32xf32>
    %46 = arith.mulf %39, %45 : vector<2x32xf32>
    %c176 = arith.constant 176 : index
    %c0_21 = arith.constant 0 : index
    %47 = vector.load %arg7[%c176, %c0_21] : memref<224x128xbf16, #tpu.memory_space<vmem>>, vector<32x128xbf16>
    %48 = arith.extf %47 : vector<32x128xbf16> to vector<32x128xf32>
    %cst_22 = arith.constant dense<0.000000e+00> : vector<2x128xf32>
    %49 = tpu.matmul %46, %48, %cst_22 {dimension_numbers = #tpu.dot_dimension_numbers<[1], [0], [0], [1], [0, 0, 1, 1], [], []>} : vector<2x32xf32>, vector<32x128xf32>, vector<2x128xf32> -> vector<2x128xf32>
    %50 = arith.addf %32, %49 : vector<2x128xf32>
    %c0_23 = arith.constant 0 : index
    %c0_24 = arith.constant 0 : index
    %c0_25 = arith.constant 0 : index
    %51 = vector.load %arg3[%c0_23, %c0_24, %c0_25] : memref<2x8x16xbf16, #tpu.memory_space<vmem>>, vector<2x8x16xbf16>
    %52 = arith.extf %51 : vector<2x8x16xbf16> to vector<2x8x16xf32>
    %53 = vector.extract_strided_slice %52 {offsets = [0, 0, 0], sizes = [2, 1, 16], strides = [1, 1, 1]} : vector<2x8x16xf32> to vector<2x1x16xf32>
    %54 = vector.shape_cast %53 : vector<2x1x16xf32> to vector<2x16xf32>
    %c96 = arith.constant 96 : index
    %c0_26 = arith.constant 0 : index
    %55 = vector.load %arg7[%c96, %c0_26] : memref<224x128xbf16, #tpu.memory_space<vmem>>, vector<16x128xbf16>
    %56 = arith.extf %55 : vector<16x128xbf16> to vector<16x128xf32>
    %cst_27 = arith.constant dense<0.000000e+00> : vector<2x128xf32>
    %57 = tpu.matmul %54, %56, %cst_27 {dimension_numbers = #tpu.dot_dimension_numbers<[1], [0], [0], [1], [0, 0, 1, 1], [], []>} : vector<2x16xf32>, vector<16x128xf32>, vector<2x128xf32> -> vector<2x128xf32>
    %58 = arith.addf %50, %57 : vector<2x128xf32>
    %59 = math.tanh %52 : vector<2x8x16xf32>
    %60 = arith.subf %52, %59 : vector<2x8x16xf32>
    %c0_28 = arith.constant 0 : index
    %c0_29 = arith.constant 0 : index
    %61 = vector.load %arg6[%c0_28, %c0_29] : memref<2x8xf32, #tpu.memory_space<vmem>>, vector<2x8xf32>
    %62 = vector.shape_cast %61 : vector<2x8xf32> to vector<2x8x1xf32>
    %63 = vector.broadcast %62 : vector<2x8x1xf32> to vector<2x8x16xf32>
    %64 = arith.mulf %60, %63 : vector<2x8x16xf32>
    %cst_30 = arith.constant dense<0.000000e+00> : vector<2x16xf32>
    %65 = vector.multi_reduction <add>, %64, %cst_30 [1] : vector<2x8x16xf32> to vector<2x16xf32>
    %cst_31 = arith.constant dense<0.000000e+00> : vector<2xf32>
    %66 = vector.multi_reduction <add>, %61, %cst_31 [1] : vector<2x8xf32> to vector<2xf32>
    %67 = vector.shape_cast %66 : vector<2xf32> to vector<2x1xf32>
    %cst_32 = arith.constant 9.99999971E-10 : f32
    %68 = vector.broadcast %cst_32 : f32 to vector<2x1xf32>
    %69 = arith.maximumf %67, %68 : vector<2x1xf32>
    %70 = tpu.reciprocal %69 {approx = true} : vector<2x1xf32> -> vector<2x1xf32>
    %71 = vector.broadcast %70 : vector<2x1xf32> to vector<2x16xf32>
    %72 = arith.mulf %65, %71 : vector<2x16xf32>
    %c208 = arith.constant 208 : index
    %c0_33 = arith.constant 0 : index
    %73 = vector.load %arg7[%c208, %c0_33] : memref<224x128xbf16, #tpu.memory_space<vmem>>, vector<16x128xbf16>
    %74 = arith.extf %73 : vector<16x128xbf16> to vector<16x128xf32>
    %cst_34 = arith.constant dense<0.000000e+00> : vector<2x128xf32>
    %75 = tpu.matmul %72, %74, %cst_34 {dimension_numbers = #tpu.dot_dimension_numbers<[1], [0], [0], [1], [0, 0, 1, 1], [], []>} : vector<2x16xf32>, vector<16x128xf32>, vector<2x128xf32> -> vector<2x128xf32>
    %76 = arith.addf %58, %75 : vector<2x128xf32>
    %c0_35 = arith.constant 0 : index
    %c0_36 = arith.constant 0 : index
    %77 = vector.load %arg8[%c0_35, %c0_36] : memref<1x128xbf16, #tpu.memory_space<vmem>>, vector<1x128xbf16>
    %78 = arith.extf %77 : vector<1x128xbf16> to vector<1x128xf32>
    %79 = vector.broadcast %78 : vector<1x128xf32> to vector<2x128xf32>
    %80 = arith.addf %76, %79 : vector<2x128xf32>
    %c0_37 = arith.constant 0 : index
    %c0_38 = arith.constant 0 : index
    %81 = vector.load %arg9[%c0_37, %c0_38] : memref<2x128xf32, #tpu.memory_space<vmem>>, vector<2x128xf32>
    tpu.vector_store %arg9[%c0_37, %c0_38], %80 {strides = array<i32>} : memref<2x128xf32, #tpu.memory_space<vmem>>, vector<2x128xf32>,
    return
  }
  func.func @transform_0(%arg0: i32) -> (i32, i32, i32) {
    %c0_i32 = arith.constant 0 : i32
    %c0_i32_0 = arith.constant 0 : i32
    %c0_i32_1 = arith.constant 0 : i32
    return %arg0, %c0_i32, %c0_i32_0 : i32, i32, i32
  }
  func.func @transform_1(%arg0: i32) -> (i32, i32, i32) {
    %c0_i32 = arith.constant 0 : i32
    %c0_i32_0 = arith.constant 0 : i32
    %c0_i32_1 = arith.constant 0 : i32
    return %arg0, %c0_i32, %c0_i32_0 : i32, i32, i32
  }
  func.func @transform_2(%arg0: i32) -> (i32, i32, i32) {
    %c0_i32 = arith.constant 0 : i32
    %c0_i32_0 = arith.constant 0 : i32
    %c0_i32_1 = arith.constant 0 : i32
    return %arg0, %c0_i32, %c0_i32_0 : i32, i32, i32
  }
  func.func @transform_3(%arg0: i32) -> (i32, i32) {
    %c0_i32 = arith.constant 0 : i32
    %c0_i32_0 = arith.constant 0 : i32
    return %arg0, %c0_i32 : i32, i32
  }
  func.func @transform_4(%arg0: i32) -> (i32, i32) {
    %c0_i32 = arith.constant 0 : i32
    %c0_i32_0 = arith.constant 0 : i32
    return %arg0, %c0_i32 : i32, i32
  }
  func.func @transform_5(%arg0: i32) -> (i32, i32) {
    %c0_i32 = arith.constant 0 : i32
    %c0_i32_0 = arith.constant 0 : i32
    return %arg0, %c0_i32 : i32, i32
  }
  func.func @transform_6(%arg0: i32) -> (i32, i32) {
    %c0_i32 = arith.constant 0 : i32
    %c0_i32_0 = arith.constant 0 : i32
    %c0_i32_1 = arith.constant 0 : i32
    return %c0_i32, %c0_i32_0 : i32, i32
  }
  func.func @transform_7(%arg0: i32) -> (i32, i32) {
    %c0_i32 = arith.constant 0 : i32
    %c0_i32_0 = arith.constant 0 : i32
    %c0_i32_1 = arith.constant 0 : i32
    return %c0_i32, %c0_i32_0 : i32, i32
  }
  func.func @transform_8(%arg0: i32) -> (i32, i32) {
    %c0_i32 = arith.constant 0 : i32
    %c0_i32_0 = arith.constant 0 : i32
    return %arg0, %c0_i32 : i32, i32
  }
}

</mosaic_0001>

<llo_original>
// kernel: tpu_custom_call.1
$region0: #{tpu_custom_call.1}
  #allocation0 [shape = 'u32[]', space=smem, size = 0x4, offset = 0x4, fixed_abs, tag = 'smem constant byte address 0x4 - core index']
  #allocation1 [shape = 'u32[72,128]{1,0:T(1,128)}', space=vmem, size = 0x9000, scoped, tag = 'internal scratch']
  %s0 = inlined_call_operand.hbm [shape: bf16[2,8,64], index: 0, kind: input, shape index: {}]
  %s1 = inlined_call_operand.hbm [shape: bf16[2,8,32], index: 1, kind: input, shape index: {}]
  %s2 = inlined_call_operand.hbm [shape: bf16[2,8,16], index: 2, kind: input, shape index: {}]
  %s3 = inlined_call_operand.vmem [shape: f32[2,8], index: 3, kind: input, shape index: {}]
  %s4 = inlined_call_operand.hbm [shape: f32[2,8], index: 4, kind: input, shape index: {}]
  %s5 = inlined_call_operand.vmem [shape: f32[2,8], index: 5, kind: input, shape index: {}]
  %s6 = inlined_call_operand.hbm [shape: bf16[224,128], index: 6, kind: input, shape index: {}]
  %s7 = inlined_call_operand.vmem [shape: bf16[1,128], index: 7, kind: input, shape index: {}]
  %s8 = inlined_call_operand.hbm [shape: f32[2,128], index: 8, kind: output, shape index: {}]
  %s9 = sld [smem:[#allocation0]]
  $region62: #{tpu_custom_call.1} parent=0
    _
  %s11 = ssub.s32 1, %s9
  %s12 = scalar_select 0, %s11, %s9
  $region1: #{tpu_custom_call.1} parent=0
    #allocation2 [shape = 'u8[4096]{0}', space=vmem, size = 0x1000, scoped, tag = 'input window, operand 0, single buffered']
    #allocation3 [shape = 's32[1]{0}', space=sflag, size = 0x4, scoped, tag = 'scoped memory for tpu_custom_call.1']
    #allocation4 [shape = 's32[1]{0}', space=sflag, size = 0x4, scoped, tag = 'scoped memory for tpu_custom_call.1']
    #allocation5 [shape = 'u8[4096]{0}', space=vmem, size = 0x1000, scoped, tag = 'input window, operand 1, single buffered']
    #allocation6 [shape = 's32[1]{0}', space=sflag, size = 0x4, scoped, tag = 'scoped memory for tpu_custom_call.1']
    #allocation7 [shape = 'u8[4096]{0}', space=vmem, size = 0x1000, scoped, tag = 'input window, operand 2, single buffered']
    #allocation8 [shape = 'u8[1024]{0}', space=vmem, size = 0x400, scoped, tag = 'input window, operand 4, single buffered']
    #allocation9 [shape = 's32[1]{0}', space=sflag, size = 0x4, scoped, tag = 'scoped memory for tpu_custom_call.1']
    #allocation10 [shape = 'u8[57344]{0}', space=vmem, size = 0xe000, scoped, tag = 'input window, operand 6, single buffered']
    #allocation11 [shape = 'u8[1024]{0}', space=vmem, size = 0x400, scoped, tag = 'output window, operand 0, single buffered']
    %13 = vsyncpa [#allocation3], 0
    %14 = vsyncpa [#allocation6], 0
    %15 = vsyncpa [#allocation9], 0
    %16 = vsyncpa [#allocation4], 0
    // Predicated region
    $region2: #{tpu_custom_call.1} parent=1 // pred_check
      _
    $region3: #{tpu_custom_call.1} parent=1 // pred_check_branch
      %18 = sbr.rel (0) target = $region5
    $region4: #{tpu_custom_call.1} parent=1 // pred_region
      %20 = vsyncadd [#allocation3], 0
      %s21 = sshll.u32 %s0, 4
      %s22 = int_to_ptr.hbm [resolvable:$true] %s21
      %s23 = sshll.u32 [#allocation2], 4
      %s24 = int_to_ptr.vmem [resolvable:$true] %s23
      %29 = dma.hbm_to_vmem [thread:$0]  %s22, 128, %s24, [#allocation3], 64, 64, 4
    $region5: #{tpu_custom_call.1} parent=1 // pred_fallthru
      _
    // Predicated region
    $region6: #{tpu_custom_call.1} parent=1 // pred_check
      _
    $region7: #{tpu_custom_call.1} parent=1 // pred_check_branch
      %31 = sbr.rel (0) target = $region9
    $region8: #{tpu_custom_call.1} parent=1 // pred_region
      %33 = vsyncadd [#allocation6], 0
      %s34 = sshll.u32 %s1, 4
      %s35 = int_to_ptr.hbm [resolvable:$true] %s34
      %s36 = sshll.u32 [#allocation5], 4
      %s37 = int_to_ptr.vmem [resolvable:$true] %s36
      %42 = dma.hbm_to_vmem [thread:$0]  %s35, 128, %s37, [#allocation6], 64, 64, 4
    $region9: #{tpu_custom_call.1} parent=1 // pred_fallthru
      _
    // Predicated region
    $region10: #{tpu_custom_call.1} parent=1 // pred_check
      _
    $region11: #{tpu_custom_call.1} parent=1 // pred_check_branch
      %44 = sbr.rel (0) target = $region13
    $region12: #{tpu_custom_call.1} parent=1 // pred_region
      %46 = vsyncadd [#allocation6], 0
      %s47 = sshll.u32 %s2, 4
      %s48 = int_to_ptr.hbm [resolvable:$true] %s47
      %s49 = sshll.u32 [#allocation7], 4
      %s50 = int_to_ptr.vmem [resolvable:$true] %s49
      %55 = dma.hbm_to_vmem [thread:$0]  %s48, 128, %s50, [#allocation6], 64, 64, 4
    $region13: #{tpu_custom_call.1} parent=1 // pred_fallthru
      _
    // Predicated region
    $region14: #{tpu_custom_call.1} parent=1 // pred_check
      _
    $region15: #{tpu_custom_call.1} parent=1 // pred_check_branch
      %57 = sbr.rel (0) target = $region17
    $region16: #{tpu_custom_call.1} parent=1 // pred_region
      _
    $region17: #{tpu_custom_call.1} parent=1 // pred_fallthru
      _
    // Predicated region
    $region18: #{tpu_custom_call.1} parent=1 // pred_check
      _
    $region19: #{tpu_custom_call.1} parent=1 // pred_check_branch
      %59 = sbr.rel (0) target = $region21
    $region20: #{tpu_custom_call.1} parent=1 // pred_region
      %61 = vsyncadd [#allocation9], 0
      %s63 = sshll.u32 %s4, 4
      %s64 = int_to_ptr.hbm [resolvable:$true] %s63
      %s65 = sshll.u32 [#allocation8], 4
      %s66 = int_to_ptr.vmem [resolvable:$true] %s65
      %68 = dma.hbm_to_vmem [thread:$0]  %s64, 32, %s66, [#allocation9]
    $region21: #{tpu_custom_call.1} parent=1 // pred_fallthru
      _
    // Predicated region
    $region22: #{tpu_custom_call.1} parent=1 // pred_check
      _
    $region23: #{tpu_custom_call.1} parent=1 // pred_check_branch
      %70 = sbr.rel (0) target = $region25
    $region24: #{tpu_custom_call.1} parent=1 // pred_region
      _
    $region25: #{tpu_custom_call.1} parent=1 // pred_fallthru
      _
    // Predicated region
    $region26: #{tpu_custom_call.1} parent=1 // pred_check
      _
    $region27: #{tpu_custom_call.1} parent=1 // pred_check_branch
      %72 = sbr.rel (0) target = $region29
    $region28: #{tpu_custom_call.1} parent=1 // pred_region
      %74 = vsyncadd [#allocation9], 0
      %s75 = sshll.u32 %s6, 4
      %s76 = int_to_ptr.hbm [resolvable:$true] %s75
      %s77 = sshll.u32 [#allocation10], 4
      %s78 = int_to_ptr.vmem [resolvable:$true] %s77
      %83 = dma.hbm_to_vmem [thread:$0]  %s76, 1792, %s78, [#allocation9], 64, 64, 4
    $region29: #{tpu_custom_call.1} parent=1 // pred_fallthru
      _
    // Predicated region
    $region30: #{tpu_custom_call.1} parent=1 // pred_check
      _
    $region31: #{tpu_custom_call.1} parent=1 // pred_check_branch
      %85 = sbr.rel (0) target = $region33
    $region32: #{tpu_custom_call.1} parent=1 // pred_region
      _
    $region33: #{tpu_custom_call.1} parent=1 // pred_fallthru
      _
    // Predicated region
    $region34: #{tpu_custom_call.1} parent=1 // pred_check
      _
    $region35: #{tpu_custom_call.1} parent=1 // pred_check_branch
      %87 = sbr.rel (0) target = $region37
    $region36: #{tpu_custom_call.1} parent=1 // pred_region
      %89 = dma.done [#allocation3], 128
    $region37: #{tpu_custom_call.1} parent=1 // pred_fallthru
      _
    // Predicated region
    $region38: #{tpu_custom_call.1} parent=1 // pred_check
      _
    $region39: #{tpu_custom_call.1} parent=1 // pred_check_branch
      %91 = sbr.rel (0) target = $region41
    $region40: #{tpu_custom_call.1} parent=1 // pred_region
      %93 = dma.done [#allocation6], 128
    $region41: #{tpu_custom_call.1} parent=1 // pred_fallthru
      _
    // Predicated region
    $region42: #{tpu_custom_call.1} parent=1 // pred_check
      _
    $region43: #{tpu_custom_call.1} parent=1 // pred_check_branch
      %95 = sbr.rel (0) target = $region45
    $region44: #{tpu_custom_call.1} parent=1 // pred_region
      %97 = dma.done [#allocation6], 128
    $region45: #{tpu_custom_call.1} parent=1 // pred_fallthru
      _
    // Predicated region
    $region46: #{tpu_custom_call.1} parent=1 // pred_check
      _
    $region47: #{tpu_custom_call.1} parent=1 // pred_check_branch
      %99 = sbr.rel (0) target = $region49
    $region48: #{tpu_custom_call.1} parent=1 // pred_region
      %101 = dma.done [#allocation9], 32
    $region49: #{tpu_custom_call.1} parent=1 // pred_fallthru
      _
    // Predicated region
    $region50: #{tpu_custom_call.1} parent=1 // pred_check
      _
    $region51: #{tpu_custom_call.1} parent=1 // pred_check_branch
      %103 = sbr.rel (0) target = $region53
    $region52: #{tpu_custom_call.1} parent=1 // pred_region
      %105 = dma.done [#allocation9], 1792
    $region53: #{tpu_custom_call.1} parent=1 // pred_fallthru
      _
    %v106 = vld [vmem:[#allocation2] sm:$0xf]
    %v107 = vld [vmem:[#allocation2 + $0x4] sm:$0xf]
    %v108 = vunpack.c.l.bf16 %v106
    %v109 = vunpack.c.l.bf16 %v107
    %v110 = vld [vmem:[#allocation10] sm:$0xf]
    %v111 = vld [vmem:[#allocation10 + $0x4] sm:$0xf]
    %v112 = vld [vmem:[#allocation10 + $0x8] sm:$0xf]
    %v113 = vld [vmem:[#allocation10 + $0xc] sm:$0xf]
    %v114 = vld [vmem:[#allocation10 + $0x10] sm:$0xf]
    %v115 = vld [vmem:[#allocation10 + $0x14] sm:$0xf]
    %v116 = vld [vmem:[#allocation10 + $0x18] sm:$0xf]
    %v117 = vld [vmem:[#allocation10 + $0x1c] sm:$0xf]
    %v118 = vunpack.c.l.bf16 %v110
    %v119 = vunpack.c.l.bf16 %v111
    %v120 = vunpack.c.l.bf16 %v112
    %v121 = vunpack.c.l.bf16 %v113
    %v122 = vunpack.c.l.bf16 %v114
    %v123 = vunpack.c.l.bf16 %v115
    %v124 = vunpack.c.l.bf16 %v116
    %v125 = vunpack.c.l.bf16 %v117
    %v126 = vtanh.pop %v108
    %v127 = vtanh.pop %v109
    %v128 = vsub.f32 %v108, %v126
    %v129 = vsub.f32 %v109, %v127
    %v130 = vld [vmem:[%s3] sm:$0x3]
    %v131 = vperm.slane %v130, 0
    %v132 = vlaneseq
    %v133 = vshrl.u32 %v132, 7
    %135 = vset.pattern.permute.xlu0 %v133
    %136 = vperm.xlu0 %135, %v131
    %v137 = vpop.permute.xlu0 %136
    %v138 = vperm.slane %v130, 1
    %v139 = vlaneseq
    %v140 = vshrl.u32 %v139, 7
    %142 = vset.pattern.permute.xlu0 %v140
    %143 = vperm.xlu0 %142, %v138
    %v144 = vpop.permute.xlu0 %143
    %v145 = vmul.f32 %v128, %v137
    %v146 = vmul.f32 %v129, %v144
    %vm147 = vcmask 523264
    %v148 = vsel %vm147, %v145, 0.0
    %v149 = vrot.slane %v148, 4
    %v150 = vadd.f32 %v148, %v149
    %v151 = vrot.slane %v150, 2
    %v152 = vadd.f32 %v150, %v151
    %v153 = vrot.slane %v152, 1
    %v154 = vadd.f32 %v152, %v153
    %v155 = vsel %vm147, %v146, 0.0
    %v156 = vrot.slane %v155, 4
    %v157 = vadd.f32 %v155, %v156
    %v158 = vrot.slane %v157, 2
    %v159 = vadd.f32 %v157, %v158
    %v160 = vrot.slane %v159, 1
    %v161 = vadd.f32 %v159, %v160
    %vm162 = vcmask 58368
    %v163 = vsel %vm162, %v130, 0.0
    %164 = vadd.xlane.f32.xlu0 %v163
    %v165 = vpop.xlane.xlu0 %164
    %v166 = vmax.f32 %v165, 1e-09
    %v167 = vrcp.pop %v166
    %v169 = vrot.slane %v167, 1
    %v172 = vmul.f32 %v154, %v167
    %v173 = vmul.f32 %v161, %v169
    %v174 = vld [vmem:[#allocation10 + $0x38] sm:$0xf]
    %v175 = vld [vmem:[#allocation10 + $0x3c] sm:$0xf]
    %v176 = vld [vmem:[#allocation10 + $0x40] sm:$0xf]
    %v177 = vld [vmem:[#allocation10 + $0x44] sm:$0xf]
    %v178 = vld [vmem:[#allocation10 + $0x48] sm:$0xf]
    %v179 = vld [vmem:[#allocation10 + $0x4c] sm:$0xf]
    %v180 = vld [vmem:[#allocation10 + $0x50] sm:$0xf]
    %v181 = vld [vmem:[#allocation10 + $0x54] sm:$0xf]
    %v182 = vunpack.c.l.bf16 %v174
    %v183 = vunpack.c.l.bf16 %v175
    %v184 = vunpack.c.l.bf16 %v176
    %v185 = vunpack.c.l.bf16 %v177
    %v186 = vunpack.c.l.bf16 %v178
    %v187 = vunpack.c.l.bf16 %v179
    %v188 = vunpack.c.l.bf16 %v180
    %v189 = vunpack.c.l.bf16 %v181
    %v192 = vrot.slane %v173, 7
    %vm193 = vcmask 1041409
    %v194 = vsel %vm193, %v192, %v172
    %v195 = vsel %vm147, %v194, 0
    %197 = vmatpush.msra.mxu0 0.0
    %198 = vmatpush.msra.mxu0 0.0
    %199 = vmatpush.msra.mxu0 0.0
    %200 = vmatpush.msra.mxu0 0.0
    %201 = vmatpush.msra.mxu0 0.0
    %202 = vmatpush.msra.mxu0 0.0
    %203 = vmatpush.msra.mxu0 0.0
    %204 = vmatpush.msra.mxu0 0.0
    %205 = vmatpush.msra.mxu0 %v189
    %206 = vmatpush.msra.mxu0 %v188
    %207 = vmatpush.msra.mxu0 %v187
    %208 = vmatpush.msra.mxu0 %v186
    %209 = vmatpush.msra.mxu0 %v185
    %210 = vmatpush.msra.mxu0 %v184
    %211 = vmatpush.msra.mxu0 %v183
    %212 = vmatpush.msra.mxu0 %v182
    %213 = vmatmul.f32.gmra.mxu0 %v195
    %v214 = vpop.f32.mrf.mxu0
    %v215 = vadd.f32 0.0, %v214
    %216 = vdwg.mxu0
    %v219 = vrot.slane %v109, 7
    %v220 = vsel %vm193, %v219, %v108
    %v221 = vsel %vm147, %v220, 0
    %223 = vmatpush.msra.mxu0 0.0
    %224 = vmatpush.msra.mxu0 0.0
    %225 = vmatpush.msra.mxu0 0.0
    %226 = vmatpush.msra.mxu0 0.0
    %227 = vmatpush.msra.mxu0 0.0
    %228 = vmatpush.msra.mxu0 0.0
    %229 = vmatpush.msra.mxu0 0.0
    %230 = vmatpush.msra.mxu0 0.0
    %231 = vmatpush.msra.mxu0 %v125
    %232 = vmatpush.msra.mxu0 %v124
    %233 = vmatpush.msra.mxu0 %v123
    %234 = vmatpush.msra.mxu0 %v122
    %235 = vmatpush.msra.mxu0 %v121
    %236 = vmatpush.msra.mxu0 %v120
    %237 = vmatpush.msra.mxu0 %v119
    %238 = vmatpush.msra.mxu0 %v118
    %239 = vmatmul.f32.gmra.mxu0 %v221
    %v240 = vpop.f32.mrf.mxu0
    %v241 = vadd.f32 %v215, %v240
    %242 = vdwg.mxu0
    %v243 = vld [vmem:[#allocation5] sm:$0xf]
    %v244 = vld [vmem:[#allocation5 + $0x4] sm:$0xf]
    %v245 = vunpack.c.l.bf16 %v243
    %v246 = vunpack.c.l.bf16 %v244
    %v247 = vld [vmem:[#allocation10 + $0x20] sm:$0xf]
    %v248 = vld [vmem:[#allocation10 + $0x24] sm:$0xf]
    %v249 = vld [vmem:[#allocation10 + $0x28] sm:$0xf]
    %v250 = vld [vmem:[#allocation10 + $0x2c] sm:$0xf]
    %v251 = vunpack.c.l.bf16 %v247
    %v252 = vunpack.c.l.bf16 %v248
    %v253 = vunpack.c.l.bf16 %v249
    %v254 = vunpack.c.l.bf16 %v250
    %v257 = vrot.slane %v246, 7
    %v258 = vsel %vm193, %v257, %v245
    %vm259 = vcmask 261120
    %v260 = vsel %vm259, %v258, 0
    %262 = vmatpush.msra.mxu0 0.0
    %263 = vmatpush.msra.mxu0 0.0
    %264 = vmatpush.msra.mxu0 0.0
    %265 = vmatpush.msra.mxu0 0.0
    %266 = vmatpush.msra.mxu0 0.0
    %267 = vmatpush.msra.mxu0 0.0
    %268 = vmatpush.msra.mxu0 0.0
    %269 = vmatpush.msra.mxu0 0.0
    %270 = vmatpush.msra.mxu0 0.0
    %271 = vmatpush.msra.mxu0 0.0
    %272 = vmatpush.msra.mxu0 0.0
    %273 = vmatpush.msra.mxu0 0.0
    %274 = vmatpush.msra.mxu0 %v254
    %275 = vmatpush.msra.mxu0 %v253
    %276 = vmatpush.msra.mxu0 %v252
    %277 = vmatpush.msra.mxu0 %v251
    %278 = vmatmul.f32.gmra.mxu0 %v260
    %v279 = vpop.f32.mrf.mxu0
    %v280 = vadd.f32 0.0, %v279
    %281 = vdwg.mxu0
    %v282 = vadd.f32 %v241, %v280
    %v283 = vtanh.pop %v245
    %v284 = vtanh.pop %v246
    %v285 = vsub.f32 %v245, %v283
    %v286 = vsub.f32 %v246, %v284
    %v287 = vld [vmem:[#allocation8] sm:$0x3]
    %v288 = vperm.slane %v287, 0
    %v289 = vlaneseq
    %v290 = vshrl.u32 %v289, 7
    %292 = vset.pattern.permute.xlu0 %v290
    %293 = vperm.xlu0 %292, %v288
    %v294 = vpop.permute.xlu0 %293
    %v295 = vperm.slane %v287, 1
    %v296 = vlaneseq
    %v297 = vshrl.u32 %v296, 7
    %299 = vset.pattern.permute.xlu0 %v297
    %300 = vperm.xlu0 %299, %v295
    %v301 = vpop.permute.xlu0 %300
    %v302 = vmul.f32 %v285, %v294
    %v303 = vmul.f32 %v286, %v301
    %v304 = vsel %vm259, %v302, 0.0
    %v305 = vrot.slane %v304, 4
    %v306 = vadd.f32 %v304, %v305
    %v307 = vrot.slane %v306, 2
    %v308 = vadd.f32 %v306, %v307
    %v309 = vrot.slane %v308, 1
    %v310 = vadd.f32 %v308, %v309
    %v311 = vsel %vm259, %v303, 0.0
    %v312 = vrot.slane %v311, 4
    %v313 = vadd.f32 %v311, %v312
    %v314 = vrot.slane %v313, 2
    %v315 = vadd.f32 %v313, %v314
    %v316 = vrot.slane %v315, 1
    %v317 = vadd.f32 %v315, %v316
    %v318 = vsel %vm162, %v287, 0.0
    %319 = vadd.xlane.f32.xlu0 %v318
    %v320 = vpop.xlane.xlu0 %319
    %v321 = vmax.f32 %v320, 1e-09
    %v322 = vrcp.pop %v321
    %v324 = vrot.slane %v322, 1
    %v327 = vmul.f32 %v310, %v322
    %v328 = vmul.f32 %v317, %v324
    %v329 = vld [vmem:[#allocation10 + $0x58] sm:$0xf]
    %v330 = vld [vmem:[#allocation10 + $0x5c] sm:$0xf]
    %v331 = vld [vmem:[#allocation10 + $0x60] sm:$0xf]
    %v332 = vld [vmem:[#allocation10 + $0x64] sm:$0xf]
    %v333 = vunpack.c.l.bf16 %v329
    %v334 = vunpack.c.l.bf16 %v330
    %v335 = vunpack.c.l.bf16 %v331
    %v336 = vunpack.c.l.bf16 %v332
    %v339 = vrot.slane %v328, 7
    %v340 = vsel %vm193, %v339, %v327
    %v341 = vsel %vm259, %v340, 0
    %343 = vmatpush.msra.mxu0 0.0
    %344 = vmatpush.msra.mxu0 0.0
    %345 = vmatpush.msra.mxu0 0.0
    %346 = vmatpush.msra.mxu0 0.0
    %347 = vmatpush.msra.mxu0 0.0
    %348 = vmatpush.msra.mxu0 0.0
    %349 = vmatpush.msra.mxu0 0.0
    %350 = vmatpush.msra.mxu0 0.0
    %351 = vmatpush.msra.mxu0 0.0
    %352 = vmatpush.msra.mxu0 0.0
    %353 = vmatpush.msra.mxu0 0.0
    %354 = vmatpush.msra.mxu0 0.0
    %355 = vmatpush.msra.mxu0 %v336
    %356 = vmatpush.msra.mxu0 %v335
    %357 = vmatpush.msra.mxu0 %v334
    %358 = vmatpush.msra.mxu0 %v333
    %359 = vmatmul.f32.gmra.mxu0 %v341
    %v360 = vpop.f32.mrf.mxu0
    %v361 = vadd.f32 0.0, %v360
    %362 = vdwg.mxu0
    %v363 = vadd.f32 %v282, %v361
    %v364 = vld [vmem:[#allocation7] sm:$0xf]
    %v365 = vld [vmem:[#allocation7 + $0x4] sm:$0xf]
    %v366 = vunpack.c.l.bf16 %v364
    %v367 = vunpack.c.l.bf16 %v365
    %v368 = vld [vmem:[#allocation10 + $0x30] sm:$0xf]
    %v369 = vld [vmem:[#allocation10 + $0x34] sm:$0xf]
    %v370 = vunpack.c.l.bf16 %v368
    %v371 = vunpack.c.l.bf16 %v369
    %v374 = vrot.slane %v367, 7
    %v375 = vsel %vm193, %v374, %v366
    %vm376 = vcmask 130048
    %v377 = vsel %vm376, %v375, 0
    %379 = vmatpush.msra.mxu0 0.0
    %380 = vmatpush.msra.mxu0 0.0
    %381 = vmatpush.msra.mxu0 0.0
    %382 = vmatpush.msra.mxu0 0.0
    %383 = vmatpush.msra.mxu0 0.0
    %384 = vmatpush.msra.mxu0 0.0
    %385 = vmatpush.msra.mxu0 0.0
    %386 = vmatpush.msra.mxu0 0.0
    %387 = vmatpush.msra.mxu0 0.0
    %388 = vmatpush.msra.mxu0 0.0
    %389 = vmatpush.msra.mxu0 0.0
    %390 = vmatpush.msra.mxu0 0.0
    %391 = vmatpush.msra.mxu0 0.0
    %392 = vmatpush.msra.mxu0 0.0
    %393 = vmatpush.msra.mxu0 %v371
    %394 = vmatpush.msra.mxu0 %v370
    %395 = vmatmul.f32.gmra.mxu0 %v377
    %v396 = vpop.f32.mrf.mxu0
    %v397 = vadd.f32 0.0, %v396
    %398 = vdwg.mxu0
    %v399 = vadd.f32 %v363, %v397
    %v400 = vtanh.pop %v366
    %v401 = vtanh.pop %v367
    %v402 = vsub.f32 %v366, %v400
    %v403 = vsub.f32 %v367, %v401
    %v404 = vld [vmem:[%s5] sm:$0x3]
    %v405 = vperm.slane %v404, 0
    %v406 = vlaneseq
    %v407 = vshrl.u32 %v406, 7
    %409 = vset.pattern.permute.xlu0 %v407
    %410 = vperm.xlu0 %409, %v405
    %v411 = vpop.permute.xlu0 %410
    %v412 = vperm.slane %v404, 1
    %v413 = vlaneseq
    %v414 = vshrl.u32 %v413, 7
    %416 = vset.pattern.permute.xlu0 %v414
    %417 = vperm.xlu0 %416, %v412
    %v418 = vpop.permute.xlu0 %417
    %v419 = vmul.f32 %v402, %v411
    %v420 = vmul.f32 %v403, %v418
    %v421 = vsel %vm376, %v419, 0.0
    %v422 = vrot.slane %v421, 4
    %v423 = vadd.f32 %v421, %v422
    %v424 = vrot.slane %v423, 2
    %v425 = vadd.f32 %v423, %v424
    %v426 = vrot.slane %v425, 1
    %v427 = vadd.f32 %v425, %v426
    %v428 = vsel %vm376, %v420, 0.0
    %v429 = vrot.slane %v428, 4
    %v430 = vadd.f32 %v428, %v429
    %v431 = vrot.slane %v430, 2
    %v432 = vadd.f32 %v430, %v431
    %v433 = vrot.slane %v432, 1
    %v434 = vadd.f32 %v432, %v433
    %v435 = vsel %vm162, %v404, 0.0
    %436 = vadd.xlane.f32.xlu0 %v435
    %v437 = vpop.xlane.xlu0 %436
    %v438 = vmax.f32 %v437, 1e-09
    %v439 = vrcp.pop %v438
    %v441 = vrot.slane %v439, 1
    %v444 = vmul.f32 %v427, %v439
    %v445 = vmul.f32 %v434, %v441
    %v446 = vld [vmem:[#allocation10 + $0x68] sm:$0xf]
    %v447 = vld [vmem:[#allocation10 + $0x6c] sm:$0xf]
    %v448 = vunpack.c.l.bf16 %v446
    %v449 = vunpack.c.l.bf16 %v447
    %v452 = vrot.slane %v445, 7
    %v453 = vsel %vm193, %v452, %v444
    %v454 = vsel %vm376, %v453, 0
    %456 = vmatpush.msra.mxu0 0.0
    %457 = vmatpush.msra.mxu0 0.0
    %458 = vmatpush.msra.mxu0 0.0
    %459 = vmatpush.msra.mxu0 0.0
    %460 = vmatpush.msra.mxu0 0.0
    %461 = vmatpush.msra.mxu0 0.0
    %462 = vmatpush.msra.mxu0 0.0
    %463 = vmatpush.msra.mxu0 0.0
    %464 = vmatpush.msra.mxu0 0.0
    %465 = vmatpush.msra.mxu0 0.0
    %466 = vmatpush.msra.mxu0 0.0
    %467 = vmatpush.msra.mxu0 0.0
    %468 = vmatpush.msra.mxu0 0.0
    %469 = vmatpush.msra.mxu0 0.0
    %470 = vmatpush.msra.mxu0 %v449
    %471 = vmatpush.msra.mxu0 %v448
    %472 = vmatmul.f32.gmra.mxu0 %v454
    %v473 = vpop.f32.mrf.mxu0
    %v474 = vadd.f32 0.0, %v473
    %475 = vdwg.mxu0
    %v476 = vadd.f32 %v399, %v474
    %v477 = vld [vmem:[%s7] sm:$0x1]
    %v478 = vunpack.c.l.bf16 %v477
    %v479 = vperm.slane %v478, 0
    %v480 = vadd.f32 %v476, %v479
    %481 = vst [vmem:[#allocation11] sm:$0x3] %v480
    // Predicated region
    $region54: #{tpu_custom_call.1} parent=1 // pred_check
      _
    $region55: #{tpu_custom_call.1} parent=1 // pred_check_branch
      %483 = sbr.rel (0) target = $region57
    $region56: #{tpu_custom_call.1} parent=1 // pred_region
      %485 = vsyncadd [#allocation4], 0
      %s487 = sshll.u32 [#allocation11], 4
      %s488 = int_to_ptr.vmem [resolvable:$true] %s487
      %s489 = sshll.u32 %s8, 4
      %s490 = int_to_ptr.hbm [resolvable:$true] %s489
      %492 = dma.vmem_to_hbm [thread:$0]  %s488, 32, %s490, [#allocation4]
    $region57: #{tpu_custom_call.1} parent=1 // pred_fallthru
      _
    // Predicated region
    $region58: #{tpu_custom_call.1} parent=1 // pred_check
      _
    $region59: #{tpu_custom_call.1} parent=1 // pred_check_branch
      %494 = sbr.rel (0) target = $region61
    $region60: #{tpu_custom_call.1} parent=1 // pred_region
      %496 = dma.done [#allocation4], 32
    $region61: #{tpu_custom_call.1} parent=1 // pred_fallthru
      _
    %497 = vsyncpa [#allocation3], 1
    %498 = vsyncpa [#allocation6], 1
    %499 = vsyncpa [#allocation9], 1
    %500 = vsyncpa [#allocation4], 1

</llo_original>
